<compile_context>
chip_gen: v6e
topology: v6e:2x2x1
jax: 0.10.0
libtpu: 0.0.40
codegen_flags: <defaults>
</compile_context>

<pallas_src>
import jax
import jax.numpy as jnp
from jax import lax
from jax.experimental import pallas as pl
from jax.experimental.pallas import tpu as pltpu

S_DIM = 64               # FrozenLake8x8 observation space
EMB_DIM = S_DIM * 5      # 320
HID_DIM = 256
OUT_DIM = 4
OUT_PAD = 128            # lane-dense padded head width (one full vreg lane dim)


def _gather_mlp_softmax_kernel(idx_ref, t_ref, w2_ref, b2_ref, out_ref):
    """Fused gather(T, idx) + ReLU + Linear2 + masked softmax.

    idx_ref : (TB, 1)    int32     state indices
    t_ref   : (64, 256)  bf16      folded table T = emb_table @ W1 + b1
    w2_ref  : (256, 128) bf16      zero-padded from (256, 4)
    b2_ref  : (1, 128)   f32       b2 in lanes < 4, -1e30 in padded lanes
    out_ref : (TB, 4)    f32       softmax probabilities
    """
    tb = idx_ref.shape[0]
    idx = idx_ref[...]                                              # (TB, 1)

    # One-hot gather through the MXU: selects rows of T by index (0/1 exact in bf16).
    cols = lax.broadcasted_iota(jnp.int32, (tb, S_DIM), 1)          # (TB, 64)
    onehot = (cols == idx).astype(jnp.bfloat16)                     # (TB, 64)
    h = jnp.dot(onehot, t_ref[...], preferred_element_type=jnp.float32)

    # Dropout(0.8) in eval mode == identity; ReLU, then bf16 for the MXU.
    h = jnp.maximum(h, 0.0).astype(jnp.bfloat16)

    # Linear(256 -> 4), computed lane-dense as 256 -> 128 with zero-padded W2.
    # Padded lanes get logits = 0 + (-1e30) from the baked-in bias, so they
    # contribute exp() == 0 to the softmax (mask is free).
    logits = jnp.dot(h, w2_ref[...], preferred_element_type=jnp.float32)
    logits = logits + b2_ref[...]

    m = jnp.max(logits, axis=1, keepdims=True)
    e = jnp.exp(logits - m)
    denom = jnp.sum(e, axis=1, keepdims=True)
    probs = e / denom                                               # exact normalization

    # Narrow store: only the 4 real action probabilities go back to HBM.
    out_ref[...] = probs[:, :OUT_DIM]


def _resident_spec(block_shape, index_map):
    """Constant-index weight spec; single-buffered when the API supports it."""
    try:
        return pl.BlockSpec(block_shape, index_map, pipeline_mode=pl.Buffered(1))
    except Exception:  # older jax without pipeline_mode / Buffered
        return pl.BlockSpec(block_shape, index_map)


def _cost_estimate(b_rows, t_table, w2_pad, b2_pad):
    return pl.CostEstimate(
        flops=2 * b_rows * (S_DIM * HID_DIM + HID_DIM * OUT_PAD),
        transcendentals=b_rows * OUT_PAD,
        bytes_accessed=(b_rows * (4 + OUT_DIM * 4)
                        + t_table.size * 2 + w2_pad.size * 2 + b2_pad.size * 4),
    )


def network_forward(x_idx, params, *, nogrid_max=2048, tb_min=512, tb_max=2048):
    """x_idx: int (B,) state indices.  Returns f32 (B, 4) action probabilities."""
    t_table, w2_pad, b2_pad = params
    B = x_idx.shape[0]

    # Pad batch to a sublane multiple (8); padded rows use index 0 and are
    # sliced off at the end.
    B_pad = max(8, ((B + 7) // 8) * 8)
    idx = (jnp.zeros((B_pad,), jnp.int32)
           .at[:B].set(x_idx.astype(jnp.int32))
           .reshape(B_pad, 1))

    cost = _cost_estimate(B_pad, t_table, w2_pad, b2_pad)

    if B_pad <= nogrid_max:
        # Small/medium workload: plain no-grid pallas_call, everything resident
        # in VMEM, zero pipeline machinery (best on single-TC v5e/v6e).
        out = pl.pallas_call(
            _gather_mlp_softmax_kernel,
            out_shape=jax.ShapeDtypeStruct((B_pad, OUT_DIM), jnp.float32),
            cost_estimate=cost,
        )(idx, t_table, w2_pad, b2_pad)
    else:
        # Large-batch path: grid over batch tiles (parallel -> shards across
        # v7x's 2 TensorCores).  Aim for >= 4 tiles, tile <= 2048 rows so the
        # per-step VMEM stays well inside v7x's 32 MiB scoped limit.
        tb = ((B_pad // 4 + 7) // 8) * 8
        tb = min(tb_max, max(tb_min, tb))
        n_tiles = (B_pad + tb - 1) // tb
        B_grid = n_tiles * tb
        if B_grid != B_pad:
            idx = jnp.pad(idx, ((0, B_grid - B_pad), (0, 0)))
        out = pl.pallas_call(
            _gather_mlp_softmax_kernel,
            out_shape=jax.ShapeDtypeStruct((B_grid, OUT_DIM), jnp.float32),
            grid=(n_tiles,),
            in_specs=[
                pl.BlockSpec((tb, 1), lambda i: (i, 0)),
                _resident_spec((S_DIM, HID_DIM), lambda i: (0, 0)),
                _resident_spec((HID_DIM, OUT_PAD), lambda i: (0, 0)),
                _resident_spec((1, OUT_PAD), lambda i: (0, 0)),
            ],
            out_specs=pl.BlockSpec((tb, OUT_DIM), lambda i: (i, 0)),
            compiler_params=pltpu.CompilerParams(
                dimension_semantics=("parallel",)),
            cost_estimate=cost,
        )(idx, t_table, w2_pad, b2_pad)

    return out[:B]


def init_params(key):
    """PyTorch-like raw parameters for the original module."""
    k0, k1, k2, k3, k4 = jax.random.split(key, 5)
    # Embedding weights ~ N(0, 1) like nn.Embedding default
    emb_table = jax.random.normal(k0, (S_DIM, EMB_DIM), jnp.float32)
    # Linear layers: uniform(-1/sqrt(fan_in), 1/sqrt(fan_in)) like nn.Linear
    lim1 = 1.0 / jnp.sqrt(jnp.float32(EMB_DIM))
    w1 = jax.random.uniform(k1, (EMB_DIM, HID_DIM), jnp.float32, -lim1, lim1)
    b1 = jax.random.uniform(k2, (HID_DIM,), jnp.float32, -lim1, lim1)
    lim2 = 1.0 / jnp.sqrt(jnp.float32(HID_DIM))
    w2 = jax.random.uniform(k3, (HID_DIM, OUT_DIM), jnp.float32, -lim2, lim2)
    b2 = jax.random.uniform(k4, (OUT_DIM,), jnp.float32, -lim2, lim2)
    return emb_table, w1, b1, w2, b2


def prepare_params(raw_params):
    """Fold Embedding+Linear1(+b1), bake the softmax mask into the head bias,
    and cast MXU operands to bf16 (one-time prep)."""
    emb_table, w1, b1, w2, b2 = raw_params
    # Exact fold (eval-mode Dropout is identity; ReLU follows the affine map):
    #   emb_table[x] @ W1 + b1 == (emb_table @ W1 + b1)[x]
    t_f32 = jnp.dot(emb_table, w1, precision=lax.Precision.HIGHEST) + b1[None, :]
    t_table = t_f32.astype(jnp.bfloat16)                                    # (64, 256)
    # Zero-pad the 4-wide head to 128 lanes; padded-lane logits are killed by
    # the -1e30 baked into the padded bias (exp underflows to exactly 0).
    w2_pad = (jnp.zeros((HID_DIM, OUT_PAD), jnp.float32)
              .at[:, :OUT_DIM].set(w2).astype(jnp.bfloat16))                # (256, 128)
    b2_pad = (jnp.full((1, OUT_PAD), -1e30, jnp.float32)
              .at[0, :OUT_DIM].set(b2))                                     # (1, 128)
    return t_table, w2_pad, b2_pad


def reference_forward(x_idx, raw_params):
    """Pure-JAX reference of the original module (eval mode)."""
    emb_table, w1, b1, w2, b2 = raw_params
    emb = emb_table[x_idx]
    h = jnp.maximum(jnp.dot(emb, w1, precision=lax.Precision.HIGHEST) + b1, 0.0)
    logits = jnp.dot(h, w2, precision=lax.Precision.HIGHEST) + b2
    return jax.nn.softmax(logits, axis=1)


if __name__ == "__main__":
    key = jax.random.PRNGKey(0)
    pkey, xkey, xkey2 = jax.random.split(key, 3)
    raw = init_params(pkey)
    params = prepare_params(raw)

    # Small demo batch -> no-grid path (everything resident in VMEM).
    B = 8
    x = jax.random.randint(xkey, (B,), 0, S_DIM, dtype=jnp.int32)
    probs = jax.block_until_ready(network_forward(x, params))
    ref = reference_forward(x, raw)
    assert probs.shape == (B, OUT_DIM)
    assert jnp.allclose(jnp.sum(probs, axis=1), 1.0, atol=1e-3)
    # bf16 weights -> slightly looser match against the f32 reference.
    assert jnp.allclose(probs, ref, atol=2e-2, rtol=2e-2)

    # Large batch -> exercises the multi-tile "parallel" gridded path.
    B2 = 6000
    x2 = jax.random.randint(xkey2, (B2,), 0, S_DIM, dtype=jnp.int32)
    probs2 = jax.block_until_ready(network_forward(x2, params))
    ref2 = reference_forward(x2, raw)
    assert probs2.shape == (B2, OUT_DIM)
    assert jnp.allclose(jnp.sum(probs2, axis=1), 1.0, atol=1e-3)
    assert jnp.allclose(probs2, ref2, atol=2e-2, rtol=2e-2)

    print("KERNEL_OK")
</pallas_src>

<mosaic_0001>
module attributes {stable_mosaic.version = 11 : i64} {
  func.func @_gather_mlp_softmax_kernel(%arg0: memref<8x1xi32, #tpu.memory_space<vmem>>, %arg1: memref<64x256xbf16, #tpu.memory_space<vmem>>, %arg2: memref<256x128xbf16, #tpu.memory_space<vmem>>, %arg3: memref<1x128xf32, #tpu.memory_space<vmem>>, %arg4: memref<8x4xf32, #tpu.memory_space<vmem>>) attributes {dimension_semantics = [], scalar_prefetch = 0 : i64, scratch_operands = 0 : i64, tpu.core_type = #tpu.core_type<tc>} {
    %c0 = arith.constant 0 : index
    %c0_0 = arith.constant 0 : index
    %0 = vector.load %arg0[%c0, %c0_0] : memref<8x1xi32, #tpu.memory_space<vmem>>, vector<8x1xi32>
    %1 = tpu.iota {dimensions = array<i32: 1>} : vector<8x64xi32>
    %2 = vector.broadcast %0 : vector<8x1xi32> to vector<8x64xi32>
    %3 = arith.cmpi eq, %1, %2 : vector<8x64xi32>
    %4 = arith.extui %3 : vector<8x64xi1> to vector<8x64xi32>
    %5 = arith.sitofp %4 : vector<8x64xi32> to vector<8x64xf32>
    %6 = arith.truncf %5 : vector<8x64xf32> to vector<8x64xbf16>
    %c0_1 = arith.constant 0 : index
    %c0_2 = arith.constant 0 : index
    %7 = vector.load %arg1[%c0_1, %c0_2] : memref<64x256xbf16, #tpu.memory_space<vmem>>, vector<64x256xbf16>
    %cst = arith.constant dense<0.000000e+00> : vector<8x256xf32>
    %8 = tpu.matmul %6, %7, %cst {dimension_numbers = #tpu.dot_dimension_numbers<[1], [0], [0], [1], [0, 0, 1, 1], [], []>} : vector<8x64xbf16>, vector<64x256xbf16>, vector<8x256xf32> -> vector<8x256xf32>
    %cst_3 = arith.constant 0.000000e+00 : f32
    %9 = vector.broadcast %cst_3 : f32 to vector<8x256xf32>
    %10 = arith.maximumf %8, %9 : vector<8x256xf32>
    %11 = arith.truncf %10 : vector<8x256xf32> to vector<8x256xbf16>
    %c0_4 = arith.constant 0 : index
    %c0_5 = arith.constant 0 : index
    %12 = vector.load %arg2[%c0_4, %c0_5] : memref<256x128xbf16, #tpu.memory_space<vmem>>, vector<256x128xbf16>
    %cst_6 = arith.constant dense<0.000000e+00> : vector<8x128xf32>
    %13 = tpu.matmul %11, %12, %cst_6 {dimension_numbers = #tpu.dot_dimension_numbers<[1], [0], [0], [1], [0, 0, 1, 1], [], []>} : vector<8x256xbf16>, vector<256x128xbf16>, vector<8x128xf32> -> vector<8x128xf32>
    %c0_7 = arith.constant 0 : index
    %c0_8 = arith.constant 0 : index
    %14 = vector.load %arg3[%c0_7, %c0_8] : memref<1x128xf32, #tpu.memory_space<vmem>>, vector<1x128xf32>
    %15 = vector.broadcast %14 : vector<1x128xf32> to vector<8x128xf32>
    %16 = arith.addf %13, %15 : vector<8x128xf32>
    %cst_9 = arith.constant dense<0xFF800000> : vector<8xf32>
    %17 = vector.multi_reduction <maximumf>, %16, %cst_9 [1] : vector<8x128xf32> to vector<8xf32>
    %18 = vector.shape_cast %17 : vector<8xf32> to vector<8x1xf32>
    %19 = vector.broadcast %18 : vector<8x1xf32> to vector<8x128xf32>
    %20 = arith.subf %16, %19 : vector<8x128xf32>
    %21 = math.exp %20 : vector<8x128xf32>
    %cst_10 = arith.constant dense<0.000000e+00> : vector<8xf32>
    %22 = vector.multi_reduction <add>, %21, %cst_10 [1] : vector<8x128xf32> to vector<8xf32>
    %23 = vector.shape_cast %22 : vector<8xf32> to vector<8x1xf32>
    %24 = vector.broadcast %23 : vector<8x1xf32> to vector<8x128xf32>
    %25 = arith.divf %21, %24 : vector<8x128xf32>
    %26 = vector.extract_strided_slice %25 {offsets = [0, 0], sizes = [8, 4], strides = [1, 1]} : vector<8x128xf32> to vector<8x4xf32>
    %c0_11 = arith.constant 0 : index
    %c0_12 = arith.constant 0 : index
    %27 = vector.load %arg4[%c0_11, %c0_12] : memref<8x4xf32, #tpu.memory_space<vmem>>, vector<8x4xf32>
    tpu.vector_store %arg4[%c0_11, %c0_12], %26 {strides = array<i32>} : memref<8x4xf32, #tpu.memory_space<vmem>>, vector<8x4xf32>,
    return
  }
}

</mosaic_0001>

<llo_original>
// kernel: tpu_custom_call.1
$region0: #{tpu_custom_call.1}
  #allocation0 [shape = 'u32[]', space=smem, size = 0x4, offset = 0x4, fixed_abs, tag = 'smem constant byte address 0x4 - core index']
  #allocation1 [shape = 'u32[144,128]{1,0:T(1,128)}', space=vmem, size = 0x12000, scoped, tag = 'internal scratch']
  %s0 = inlined_call_operand.vmem [shape: s32[8,1], index: 0, kind: input, shape index: {}]
  %s1 = inlined_call_operand.hbm [shape: bf16[64,256], index: 1, kind: input, shape index: {}]
  %s2 = inlined_call_operand.hbm [shape: bf16[256,128], index: 2, kind: input, shape index: {}]
  %s3 = inlined_call_operand.vmem [shape: f32[1,128], index: 3, kind: input, shape index: {}]
  %s4 = inlined_call_operand.vmem [shape: f32[8,4], index: 4, kind: output, shape index: {}]
  %s5 = sld [smem:[#allocation0]]
  $region34: #{tpu_custom_call.1} parent=0
    _
  %s7 = ssub.s32 1, %s5
  %s8 = scalar_select 0, %s7, %s5
  $region1: #{tpu_custom_call.1} parent=0
    #allocation2 [shape = 'u8[32768]{0}', space=vmem, size = 0x8000, scoped, tag = 'input window, operand 1, single buffered']
    #allocation3 [shape = 's32[1]{0}', space=sflag, size = 0x4, scoped, tag = 'scoped memory for tpu_custom_call.1']
    #allocation4 [shape = 'u8[65536]{0}', space=vmem, size = 0x10000, scoped, tag = 'input window, operand 2, single buffered']
    #allocation5 [shape = 's32[1]{0}', space=sflag, size = 0x4, scoped, tag = 'scoped memory for tpu_custom_call.1']
    %9 = vsyncpa [#allocation3], 0
    %10 = vsyncpa [#allocation5], 0
    // Predicated region
    $region2: #{tpu_custom_call.1} parent=1 // pred_check
      _
    $region3: #{tpu_custom_call.1} parent=1 // pred_check_branch
      %12 = sbr.rel (0) target = $region5
    $region4: #{tpu_custom_call.1} parent=1 // pred_region
      _
    $region5: #{tpu_custom_call.1} parent=1 // pred_fallthru
      _
    // Predicated region
    $region6: #{tpu_custom_call.1} parent=1 // pred_check
      _
    $region7: #{tpu_custom_call.1} parent=1 // pred_check_branch
      %14 = sbr.rel (0) target = $region9
    $region8: #{tpu_custom_call.1} parent=1 // pred_region
      %s16 = ssub.s32 1024, 1024
      %17 = vsyncadd [#allocation3], %s16
      %s18 = sshll.u32 [#allocation2], 4
      %s19 = int_to_ptr.vmem [resolvable:$true] %s18
      %24 = dma.hbm_to_vmem [thread:$0]  %s1, 1024, %s19, [#allocation3], 128, 128, 8
    $region9: #{tpu_custom_call.1} parent=1 // pred_fallthru
      _
    // Predicated region
    $region10: #{tpu_custom_call.1} parent=1 // pred_check
      _
    $region11: #{tpu_custom_call.1} parent=1 // pred_check_branch
      %26 = sbr.rel (0) target = $region13
    $region12: #{tpu_custom_call.1} parent=1 // pred_region
      %s28 = ssub.s32 2048, 2048
      %29 = vsyncadd [#allocation5], %s28
      %s30 = sshll.u32 [#allocation4], 4
      %s31 = int_to_ptr.vmem [resolvable:$true] %s30
      %36 = dma.hbm_to_vmem [thread:$0]  %s2, 2048, %s31, [#allocation5], 64, 64, 4
    $region13: #{tpu_custom_call.1} parent=1 // pred_fallthru
      _
    // Predicated region
    $region14: #{tpu_custom_call.1} parent=1 // pred_check
      _
    $region15: #{tpu_custom_call.1} parent=1 // pred_check_branch
      %38 = sbr.rel (0) target = $region17
    $region16: #{tpu_custom_call.1} parent=1 // pred_region
      _
    $region17: #{tpu_custom_call.1} parent=1 // pred_fallthru
      _
    // Predicated region
    $region18: #{tpu_custom_call.1} parent=1 // pred_check
      _
    $region19: #{tpu_custom_call.1} parent=1 // pred_check_branch
      %40 = sbr.rel (0) target = $region21
    $region20: #{tpu_custom_call.1} parent=1 // pred_region
      %41 = dma.done [#allocation3], 1024
    $region21: #{tpu_custom_call.1} parent=1 // pred_fallthru
      _
    // Predicated region
    $region22: #{tpu_custom_call.1} parent=1 // pred_check
      _
    $region23: #{tpu_custom_call.1} parent=1 // pred_check_branch
      %43 = sbr.rel (0) target = $region25
    $region24: #{tpu_custom_call.1} parent=1 // pred_region
      %44 = dma.done [#allocation5], 2048
    $region25: #{tpu_custom_call.1} parent=1 // pred_fallthru
      _
    %v46 = vld [vmem:[%s0] sm:$0xff]
    %v47 = vlaneseq
    %v48 = vand.u32 %v47, 127
    %49 = vset.pattern.permute.xlu0 0
    %50 = vperm.xlu0 %49, %v46
    %v51 = vpop.permute.xlu0 %50
    %vm52 = vcmp.eq.s32.totalorder %v48, %v51
    %v53 = vsel %vm52, 1, 0
    %v54 = vcvt.s32.f32 %v53
    %v55 = vpack.c.bf16 %v54, %v54
    %v56 = vld [vmem:[#allocation2] sm:$0xff]
    %v57 = vld [vmem:[#allocation2 + $0x8] sm:$0xff]
    %v58 = vld [vmem:[#allocation2 + $0x10] sm:$0xff]
    %v59 = vld [vmem:[#allocation2 + $0x18] sm:$0xff]
    %v60 = vld [vmem:[#allocation2 + $0x20] sm:$0xff]
    %v61 = vld [vmem:[#allocation2 + $0x28] sm:$0xff]
    %v62 = vld [vmem:[#allocation2 + $0x30] sm:$0xff]
    %v63 = vld [vmem:[#allocation2 + $0x38] sm:$0xff]
    %v72 = vunpack.c.l.b16 %v56
    %v73 = vunpack.c.h.b16 %v56
    %v74 = vunpack.c.l.b16 %v57
    %v75 = vunpack.c.h.b16 %v57
    %v76 = vunpack.c.l.b16 %v58
    %v77 = vunpack.c.h.b16 %v58
    %v78 = vunpack.c.l.b16 %v59
    %v79 = vunpack.c.h.b16 %v59
    %v80 = vunpack.c.l.b16 %v60
    %v81 = vunpack.c.h.b16 %v60
    %v82 = vunpack.c.l.b16 %v61
    %v83 = vunpack.c.h.b16 %v61
    %v84 = vunpack.c.l.b16 %v62
    %v85 = vunpack.c.h.b16 %v62
    %v86 = vunpack.c.l.b16 %v63
    %v87 = vunpack.c.h.b16 %v63
    %v88 = vpack.c.b16 %v74, %v72
    %v89 = vpack.c.b16 %v75, %v73
    %v90 = vpack.c.b16 %v78, %v76
    %v91 = vpack.c.b16 %v79, %v77
    %v92 = vpack.c.b16 %v82, %v80
    %v93 = vpack.c.b16 %v83, %v81
    %v94 = vpack.c.b16 %v86, %v84
    %v95 = vpack.c.b16 %v87, %v85
    %vm104 = vcmask 523264
    %v106 = vsel %vm104, %v55, 0
    %108 = vmatprep.subr.bf16.mxu0 0
    %109 = vmatpush1.bf16.msra.mxu0 0
    %110 = vmatprep.subr.bf16.mxu0 0
    %111 = vmatpush1.bf16.msra.mxu0 0
    %112 = vmatprep.subr.bf16.mxu0 0
    %113 = vmatpush1.bf16.msra.mxu0 0
    %114 = vmatprep.subr.bf16.mxu0 0
    %115 = vmatpush1.bf16.msra.mxu0 0
    %116 = vmatprep.subr.bf16.mxu0 %v95
    %117 = vmatpush1.bf16.msra.mxu0 %v94
    %118 = vmatprep.subr.bf16.mxu0 %v93
    %119 = vmatpush1.bf16.msra.mxu0 %v92
    %120 = vmatprep.subr.bf16.mxu0 %v91
    %121 = vmatpush1.bf16.msra.mxu0 %v90
    %122 = vmatprep.subr.bf16.mxu0 %v89
    %123 = vmatpush1.bf16.msra.mxu0 %v88
    %124 = vmatprep.subr.bf16.mxu0 0
    %125 = vmatpush2.bf16.msra.mxu0 0
    %126 = vmatprep.subr.bf16.mxu0 0
    %127 = vmatpush2.bf16.msra.mxu0 0
    %128 = vmatprep.subr.bf16.mxu0 0
    %129 = vmatpush2.bf16.msra.mxu0 0
    %130 = vmatprep.subr.bf16.mxu0 0
    %131 = vmatpush2.bf16.msra.mxu0 0
    %132 = vmatprep.subr.bf16.mxu0 0
    %133 = vmatpush2.bf16.msra.mxu0 0
    %134 = vmatprep.subr.bf16.mxu0 0
    %135 = vmatpush2.bf16.msra.mxu0 0
    %136 = vmatprep.subr.bf16.mxu0 0
    %137 = vmatpush2.bf16.msra.mxu0 0
    %138 = vmatprep.subr.bf16.mxu0 0
    %139 = vmatpush2.bf16.msra.mxu0 0
    %140 = vmatprep.mubr.bf16.mxu0 0
    %141 = vmatmul.mubr.bf16.gmra.mxu0 %v106
    %v142 = vpop.f32.mrf.mxu0
    %v143 = vadd.f32 0.0, %v142
    %v144 = vpop.f32.mrf.mxu0
    %v145 = vadd.f32 0.0, %v144
    %v146 = vpop.f32.mrf.mxu0
    %v147 = vpop.f32.mrf.mxu0
    %148 = vdwg.mxu0
    %v149 = vmax.f32 %v143, 0.0
    %v150 = vmax.f32 %v145, 0.0
    %v151 = vpack.c.bf16 %v149, %v149
    %v152 = vpack.c.bf16 %v150, %v150
    %v153 = vld [vmem:[#allocation4] sm:$0xf]
    %v154 = vld [vmem:[#allocation4 + $0x4] sm:$0xf]
    %v155 = vld [vmem:[#allocation4 + $0x8] sm:$0xf]
    %v156 = vld [vmem:[#allocation4 + $0xc] sm:$0xf]
    %v157 = vld [vmem:[#allocation4 + $0x10] sm:$0xf]
    %v158 = vld [vmem:[#allocation4 + $0x14] sm:$0xf]
    %v159 = vld [vmem:[#allocation4 + $0x18] sm:$0xf]
    %v160 = vld [vmem:[#allocation4 + $0x1c] sm:$0xf]
    %v161 = vld [vmem:[#allocation4 + $0x20] sm:$0xf]
    %v162 = vld [vmem:[#allocation4 + $0x24] sm:$0xf]
    %v163 = vld [vmem:[#allocation4 + $0x28] sm:$0xf]
    %v164 = vld [vmem:[#allocation4 + $0x2c] sm:$0xf]
    %v165 = vld [vmem:[#allocation4 + $0x30] sm:$0xf]
    %v166 = vld [vmem:[#allocation4 + $0x34] sm:$0xf]
    %v167 = vld [vmem:[#allocation4 + $0x38] sm:$0xf]
    %v168 = vld [vmem:[#allocation4 + $0x3c] sm:$0xf]
    %v169 = vld [vmem:[#allocation4 + $0x40] sm:$0xf]
    %v170 = vld [vmem:[#allocation4 + $0x44] sm:$0xf]
    %v171 = vld [vmem:[#allocation4 + $0x48] sm:$0xf]
    %v172 = vld [vmem:[#allocation4 + $0x4c] sm:$0xf]
    %v173 = vld [vmem:[#allocation4 + $0x50] sm:$0xf]
    %v174 = vld [vmem:[#allocation4 + $0x54] sm:$0xf]
    %v175 = vld [vmem:[#allocation4 + $0x58] sm:$0xf]
    %v176 = vld [vmem:[#allocation4 + $0x5c] sm:$0xf]
    %v177 = vld [vmem:[#allocation4 + $0x60] sm:$0xf]
    %v178 = vld [vmem:[#allocation4 + $0x64] sm:$0xf]
    %v179 = vld [vmem:[#allocation4 + $0x68] sm:$0xf]
    %v180 = vld [vmem:[#allocation4 + $0x6c] sm:$0xf]
    %v181 = vld [vmem:[#allocation4 + $0x70] sm:$0xf]
    %v182 = vld [vmem:[#allocation4 + $0x74] sm:$0xf]
    %v183 = vld [vmem:[#allocation4 + $0x78] sm:$0xf]
    %v184 = vld [vmem:[#allocation4 + $0x7c] sm:$0xf]
    %v185 = vld [vmem:[%s3] sm:$0x1]
    %v187 = vlaneseq
    %v188 = vshrl.u32 %v187, 7
    %v189 = vsub.s32 0, %v188
    %v190 = vrot.slane %v185, %v189
    %v224 = vunpack.c.l.b16 %v153
    %v225 = vunpack.c.l.b16 %v154
    %v226 = vunpack.c.l.b16 %v155
    %v227 = vunpack.c.l.b16 %v156
    %v228 = vunpack.c.l.b16 %v157
    %v229 = vunpack.c.l.b16 %v158
    %v230 = vunpack.c.l.b16 %v159
    %v231 = vunpack.c.l.b16 %v160
    %v232 = vunpack.c.l.b16 %v161
    %v233 = vunpack.c.l.b16 %v162
    %v234 = vunpack.c.l.b16 %v163
    %v235 = vunpack.c.l.b16 %v164
    %v236 = vunpack.c.l.b16 %v165
    %v237 = vunpack.c.l.b16 %v166
    %v238 = vunpack.c.l.b16 %v167
    %v239 = vunpack.c.l.b16 %v168
    %v240 = vunpack.c.l.b16 %v169
    %v241 = vunpack.c.l.b16 %v170
    %v242 = vunpack.c.l.b16 %v171
    %v243 = vunpack.c.l.b16 %v172
    %v244 = vunpack.c.l.b16 %v173
    %v245 = vunpack.c.l.b16 %v174
    %v246 = vunpack.c.l.b16 %v175
    %v247 = vunpack.c.l.b16 %v176
    %v248 = vunpack.c.l.b16 %v177
    %v249 = vunpack.c.l.b16 %v178
    %v250 = vunpack.c.l.b16 %v179
    %v251 = vunpack.c.l.b16 %v180
    %v252 = vunpack.c.l.b16 %v181
    %v253 = vunpack.c.l.b16 %v182
    %v254 = vunpack.c.l.b16 %v183
    %v255 = vunpack.c.l.b16 %v184
    %v256 = vpack.c.b16 %v225, %v224
    %v257 = vpack.c.b16 %v227, %v226
    %v258 = vpack.c.b16 %v229, %v228
    %v259 = vpack.c.b16 %v231, %v230
    %v260 = vpack.c.b16 %v233, %v232
    %v261 = vpack.c.b16 %v235, %v234
    %v262 = vpack.c.b16 %v237, %v236
    %v263 = vpack.c.b16 %v239, %v238
    %v264 = vpack.c.b16 %v241, %v240
    %v265 = vpack.c.b16 %v243, %v242
    %v266 = vpack.c.b16 %v245, %v244
    %v267 = vpack.c.b16 %v247, %v246
    %v268 = vpack.c.b16 %v249, %v248
    %v269 = vpack.c.b16 %v251, %v250
    %v270 = vpack.c.b16 %v253, %v252
    %v271 = vpack.c.b16 %v255, %v254
    %288 = vmatprep.subr.bf16.mxu0 0
    %289 = vmatpush1.bf16.msra.mxu0 %v263
    %290 = vmatprep.subr.bf16.mxu0 0
    %291 = vmatpush1.bf16.msra.mxu0 %v262
    %292 = vmatprep.subr.bf16.mxu0 0
    %293 = vmatpush1.bf16.msra.mxu0 %v261
    %294 = vmatprep.subr.bf16.mxu0 0
    %295 = vmatpush1.bf16.msra.mxu0 %v260
    %296 = vmatprep.subr.bf16.mxu0 0
    %297 = vmatpush1.bf16.msra.mxu0 %v259
    %298 = vmatprep.subr.bf16.mxu0 0
    %299 = vmatpush1.bf16.msra.mxu0 %v258
    %300 = vmatprep.subr.bf16.mxu0 0
    %301 = vmatpush1.bf16.msra.mxu0 %v257
    %302 = vmatprep.subr.bf16.mxu0 0
    %303 = vmatpush1.bf16.msra.mxu0 %v256
    %304 = vmatprep.subr.bf16.mxu0 0
    %305 = vmatpush2.bf16.msra.mxu0 %v271
    %306 = vmatprep.subr.bf16.mxu0 0
    %307 = vmatpush2.bf16.msra.mxu0 %v270
    %308 = vmatprep.subr.bf16.mxu0 0
    %309 = vmatpush2.bf16.msra.mxu0 %v269
    %310 = vmatprep.subr.bf16.mxu0 0
    %311 = vmatpush2.bf16.msra.mxu0 %v268
    %312 = vmatprep.subr.bf16.mxu0 0
    %313 = vmatpush2.bf16.msra.mxu0 %v267
    %314 = vmatprep.subr.bf16.mxu0 0
    %315 = vmatpush2.bf16.msra.mxu0 %v266
    %316 = vmatprep.subr.bf16.mxu0 0
    %317 = vmatpush2.bf16.msra.mxu0 %v265
    %318 = vmatprep.subr.bf16.mxu0 0
    %319 = vmatpush2.bf16.msra.mxu0 %v264
    %320 = vmatprep.mubr.bf16.mxu0 %v152
    %321 = vmatmul.mubr.bf16.gmra.mxu0 %v151
    %v322 = vpop.f32.mrf.mxu0
    %v323 = vadd.f32 %v190, %v322
    %v324 = vpop.f32.mrf.mxu0
    %v325 = vpop.f32.mrf.mxu0
    %v326 = vpop.f32.mrf.mxu0
    %327 = vdwg.mxu0
    %328 = vmax.xlane.f32.xlu0 %v323
    %v329 = vpop.xlane.xlu0 %328
    %v330 = vsub.f32 %v323, %v329
    %v331 = vmul.f32 %v330, 1.442695
    %v332 = vpow.pop %v331
    %333 = vadd.xlane.f32.xlu0 %v332
    %v334 = vpop.xlane.xlu0 %333
    %v335 = vrcp.pop %v334
    %v336 = vmul.f32 %v332, %v335
    %vm337 = vcmask 31744
    %338 = vst.msk [vmem:[%s4] sm:$0xff] %vm337, %v336
    // Predicated region
    $region26: #{tpu_custom_call.1} parent=1 // pred_check
      _
    $region27: #{tpu_custom_call.1} parent=1 // pred_check_branch
      %340 = sbr.rel (0) target = $region29
    $region28: #{tpu_custom_call.1} parent=1 // pred_region
      _
    $region29: #{tpu_custom_call.1} parent=1 // pred_fallthru
      _
    // Predicated region
    $region30: #{tpu_custom_call.1} parent=1 // pred_check
      _
    $region31: #{tpu_custom_call.1} parent=1 // pred_check_branch
      %342 = sbr.rel (0) target = $region33
    $region32: #{tpu_custom_call.1} parent=1 // pred_region
      _
    $region33: #{tpu_custom_call.1} parent=1 // pred_fallthru
      _
    %343 = vsyncpa [#allocation3], 1
    %344 = vsyncpa [#allocation5], 1

</llo_original>
